<compile_context>
chip_gen: v7x
topology: tpu7x:2x2x1
jax: 0.10.0
libtpu: 0.0.40
codegen_flags: <defaults>
</compile_context>

<pallas_src>
import functools

import jax
import jax.numpy as jnp
from jax.experimental import pallas as pl
from jax.experimental.pallas import tpu as pltpu


def _round_up(x: int, m: int) -> int:
    return ((x + m - 1) // m) * m


def _linear_kernel(x_ref, w_ref, b_ref, o_ref):
    """One (tm, tn) output tile: full-K matmul + bias broadcast. No accumulator."""
    # In-kernel cast of the x tile to the weight dtype (no-op for the f32 path).
    x = x_ref[...].astype(w_ref.dtype)
    acc = jnp.dot(x, w_ref[...], preferred_element_type=jnp.float32)
    o_ref[...] = (acc + b_ref[...]).astype(o_ref.dtype)


def prepare_params(w_t, b, *, tn=512, dtype=jnp.bfloat16):
    """Pad (and cast) the static Linear parameters once, outside the per-call path.

    w_t : (embedding_dim, num_classes)  -- PyTorch weight, pre-transposed
    b   : (num_classes,) or (1, num_classes)
    dtype : weight compute dtype.  Defaults to bf16 (native MXU input on
            v5e/v6e/v7x, halves the dominant HBM weight stream).  Pass
            jnp.float32 to keep a full-precision weight path.
    The bias is always kept in float32 (tiny, preserves logit accuracy).
    Returns (w_padded : (K, Np), b_padded : (1, Np)) with Np lane-aligned.
    """
    if b.ndim == 1:
        b = b[None, :]
    K, N = w_t.shape
    Np = _round_up(N, 128) if N <= tn else _round_up(N, tn)
    if dtype is not None:
        w_t = w_t.astype(dtype)
    b = b.astype(jnp.float32)
    if Np != N:
        w_t = jnp.pad(w_t, ((0, 0), (0, Np - N)))
        b = jnp.pad(b, ((0, 0), (0, Np - N)))
    return w_t, b


@functools.partial(jax.jit, static_argnames=("num_classes", "tn"))
def card_classifier_forward(x, wp, bp, *, num_classes, tn=512):
    """y = x @ wp + bp, returning (M, num_classes). wp/bp come from prepare_params."""
    M, K = x.shape
    Kw, Np = wp.shape
    assert K == Kw and bp.shape == (1, Np)

    x_b = x.dtype.itemsize
    w_b = wp.dtype.itemsize
    out_dtype = x.dtype
    o_b = jnp.dtype(out_dtype).itemsize

    # ---- VMEM budget (generation-aware) -----------------------------------
    try:
        vmem_cap = pltpu.get_tpu_info().vmem_capacity_bytes
    except Exception:  # conservative (v7x-sized) fallback
        vmem_cap = 64 * 1024 * 1024
    # 64 MiB on 128-MiB chips (v5e/v6e); ~45 MiB on v7x to leave Mosaic headroom.
    vmem_limit = min(64 * 1024 * 1024, int(vmem_cap * 0.7))
    budget = vmem_limit - 4 * 1024 * 1024

    # ---- tile sizes (K-aware: biggest tm whose pipelined tiles fit VMEM) ---
    tn_eff = Np if Np <= tn else tn
    assert Np % tn_eff == 0, "prepare_params must be called with the same tn"
    n_tiles = Np // tn_eff

    tm_cap = _round_up(M, 8)
    tm_eff = 8
    for cand in (1024, 512, 256, 128, 64, 32, 16, 8):
        tm_c = min(cand, tm_cap)
        need = (
            2 * (tm_c * K * x_b + K * tn_eff * w_b + tm_c * tn_eff * o_b + tn_eff * 4)
            + tm_c * K * w_b  # in-kernel cast temporary
        )
        if need <= budget:
            tm_eff = tm_c
            break
    # NOTE: for classifier-head sizes (K up to a few thousand) the full-K tiles
    # always fit; for extreme K one would additionally tile K (not needed here).
    m_tiles = pl.cdiv(M, tm_eff)  # no M padding: last block is partial & masked

    flops = 2 * M * K * Np
    bytes_accessed = (
        M * K * x_b                                   # x fetched once per M tile
        + K * Np * w_b * (m_tiles if n_tiles > 1 else 1)  # W re-streamed per M tile only if N is tiled
        + Np * 4
        + M * Np * o_b
    )

    out = pl.pallas_call(
        _linear_kernel,
        out_shape=jax.ShapeDtypeStruct((M, Np), out_dtype),
        grid_spec=pltpu.PrefetchScalarGridSpec(
            num_scalar_prefetch=0,
            # M outermost (shardable across v7x's 2 TensorCores), N innermost.
            grid=(m_tiles, n_tiles),
            in_specs=[
                pl.BlockSpec((tm_eff, K), lambda i, j: (i, 0)),    # x tile (outer-axis only)
                pl.BlockSpec((K, tn_eff), lambda i, j: (0, j)),    # W tile
                pl.BlockSpec((1, tn_eff), lambda i, j: (0, j)),    # bias tile (f32)
            ],
            out_specs=pl.BlockSpec((tm_eff, tn_eff), lambda i, j: (i, j)),
        ),
        compiler_params=pltpu.CompilerParams(
            dimension_semantics=("parallel", "parallel"),
            vmem_limit_bytes=vmem_limit,
        ),
        cost_estimate=pl.CostEstimate(
            flops=flops, transcendentals=0, bytes_accessed=bytes_accessed
        ),
    )(x, wp, bp)

    if Np != num_classes:
        out = out[:, :num_classes]
    return out


def init_params(key, embedding_dim, num_classes, dtype=jnp.float32):
    """Deterministic synthetic params matching nn.Linear(embedding_dim, num_classes)."""
    kw, kb = jax.random.split(key)
    bound = 1.0 / (embedding_dim ** 0.5)  # PyTorch default uniform init range
    w_t = jax.random.uniform(
        kw, (embedding_dim, num_classes), dtype=dtype, minval=-bound, maxval=bound
    )
    bias = jax.random.uniform(
        kb, (1, num_classes), dtype=dtype, minval=-bound, maxval=bound
    )
    return w_t, bias


if __name__ == "__main__":
    # Case 1: default bf16-weight path, MXU/lane-aligned shapes (no padding/slicing).
    key = jax.random.PRNGKey(0)
    k_x, k_p = jax.random.split(key)
    batch, embedding_dim, num_classes = 8, 256, 128
    x = jax.random.normal(k_x, (batch, embedding_dim), dtype=jnp.float32)
    w_t, bias = init_params(k_p, embedding_dim, num_classes)
    wp, bp = prepare_params(w_t, bias)  # bf16 weights, f32 bias
    y = jax.block_until_ready(
        card_classifier_forward(x, wp, bp, num_classes=num_classes)
    )
    # Reference uses the same bf16-input / f32-accumulate math as the kernel.
    y_ref = (
        jnp.dot(
            x.astype(jnp.bfloat16),
            w_t.astype(jnp.bfloat16),
            preferred_element_type=jnp.float32,
        )
        + bias
    )
    assert y.shape == (batch, num_classes)
    assert jnp.allclose(y, y_ref, atol=1e-2, rtol=1e-2)

    # Case 2: tiny unaligned shapes with full-f32 weights (exercises the partial
    # M block, the N padding + final slice, and the no-cast branch).
    k_x2, k_p2 = jax.random.split(jax.random.PRNGKey(1))
    batch2, emb2, nc2 = 2, 32, 16
    x2 = jax.random.normal(k_x2, (batch2, emb2), dtype=jnp.float32)
    w2, b2 = init_params(k_p2, emb2, nc2)
    wp2, bp2 = prepare_params(w2, b2, dtype=jnp.float32)
    y2 = jax.block_until_ready(
        card_classifier_forward(x2, wp2, bp2, num_classes=nc2)
    )
    # Tolerance deliberately covers the MXU's default (bf16-pass) f32 precision.
    y2_ref = jnp.dot(x2, w2, precision=jax.lax.Precision.HIGHEST) + b2
    assert y2.shape == (batch2, nc2)
    assert jnp.allclose(y2, y2_ref, atol=2e-2, rtol=2e-2)

    print("KERNEL_OK")
</pallas_src>

<mosaic_0001>
module attributes {stable_mosaic.version = 11 : i64} {
  func.func @_linear_kernel(%arg0: i32, %arg1: i32, %arg2: memref<8x256xf32, #tpu.memory_space<vmem>>, %arg3: memref<256x128xbf16, #tpu.memory_space<vmem>>, %arg4: memref<1x128xf32, #tpu.memory_space<vmem>>, %arg5: memref<8x128xf32, #tpu.memory_space<vmem>>) attributes {dimension_semantics = [#tpu.dimension_semantics<parallel>, #tpu.dimension_semantics<parallel>], iteration_bounds = array<i64: 1, 1>, scalar_prefetch = 0 : i64, scratch_operands = 0 : i64, tpu.core_type = #tpu.core_type<tc>, window_params = [{transform_indices = @transform_0, window_bounds = array<i64: 8, 256>}, {transform_indices = @transform_1, window_bounds = array<i64: 256, 128>}, {transform_indices = @transform_2, window_bounds = array<i64: 1, 128>}, {transform_indices = @transform_3, window_bounds = array<i64: 8, 128>}]} {
    %c0 = arith.constant 0 : index
    %c0_0 = arith.constant 0 : index
    %0 = vector.load %arg2[%c0, %c0_0] : memref<8x256xf32, #tpu.memory_space<vmem>>, vector<8x256xf32>
    %1 = arith.truncf %0 : vector<8x256xf32> to vector<8x256xbf16>
    %c0_1 = arith.constant 0 : index
    %c0_2 = arith.constant 0 : index
    %2 = vector.load %arg3[%c0_1, %c0_2] : memref<256x128xbf16, #tpu.memory_space<vmem>>, vector<256x128xbf16>
    %cst = arith.constant dense<0.000000e+00> : vector<8x128xf32>
    %3 = tpu.matmul %1, %2, %cst {dimension_numbers = #tpu.dot_dimension_numbers<[1], [0], [0], [1], [0, 0, 1, 1], [], []>} : vector<8x256xbf16>, vector<256x128xbf16>, vector<8x128xf32> -> vector<8x128xf32>
    %c0_3 = arith.constant 0 : index
    %c0_4 = arith.constant 0 : index
    %4 = vector.load %arg4[%c0_3, %c0_4] : memref<1x128xf32, #tpu.memory_space<vmem>>, vector<1x128xf32>
    %5 = vector.broadcast %4 : vector<1x128xf32> to vector<8x128xf32>
    %6 = arith.addf %3, %5 : vector<8x128xf32>
    %c0_5 = arith.constant 0 : index
    %c0_6 = arith.constant 0 : index
    %7 = vector.load %arg5[%c0_5, %c0_6] : memref<8x128xf32, #tpu.memory_space<vmem>>, vector<8x128xf32>
    tpu.vector_store %arg5[%c0_5, %c0_6], %6 {strides = array<i32>} : memref<8x128xf32, #tpu.memory_space<vmem>>, vector<8x128xf32>,
    return
  }
  func.func @transform_0(%arg0: i32, %arg1: i32) -> (i32, i32) {
    %c0_i32 = arith.constant 0 : i32
    %c0_i32_0 = arith.constant 0 : i32
    return %arg0, %c0_i32 : i32, i32
  }
  func.func @transform_1(%arg0: i32, %arg1: i32) -> (i32, i32) {
    %c0_i32 = arith.constant 0 : i32
    %c0_i32_0 = arith.constant 0 : i32
    return %c0_i32, %arg1 : i32, i32
  }
  func.func @transform_2(%arg0: i32, %arg1: i32) -> (i32, i32) {
    %c0_i32 = arith.constant 0 : i32
    %c0_i32_0 = arith.constant 0 : i32
    return %c0_i32, %arg1 : i32, i32
  }
  func.func @transform_3(%arg0: i32, %arg1: i32) -> (i32, i32) {
    %c0_i32 = arith.constant 0 : i32
    return %arg0, %arg1 : i32, i32
  }
}

</mosaic_0001>

<llo_original>
// kernel: card_classifier_forward.1
$region0: #{card_classifier_forward.1}
  #allocation0 [shape = 'u32[]', space=smem, size = 0x4, offset = 0x4, fixed_abs, tag = 'smem constant byte address 0x4 - core index']
  #allocation1 [shape = 'u32[144,128]{1,0:T(1,128)}', space=vmem, size = 0x12000, scoped, tag = 'internal scratch']
  %s0 = inlined_call_operand.hbm [shape: f32[8,256], index: 0, kind: input, shape index: {}]
  %s1 = inlined_call_operand.hbm [shape: bf16[256,128], index: 1, kind: input, shape index: {}]
  %s2 = inlined_call_operand.vmem [shape: f32[1,128], index: 2, kind: input, shape index: {}]
  %s3 = inlined_call_operand.hbm [shape: f32[8,128], index: 3, kind: output, shape index: {}]
  %s4 = sld [smem:[#allocation0]]
  $region30: #{card_classifier_forward.1} parent=0
    _
  %s6 = ssub.s32 1, %s4
  %s7 = scalar_select 0, %s6, %s4
  $region1: #{card_classifier_forward.1} parent=0
    #allocation2 [shape = 'u8[8192]{0}', space=vmem, size = 0x2000, scoped, tag = 'input window, operand 0, single buffered']
    #allocation3 [shape = 's32[1]{0}', space=sflag, size = 0x4, scoped, tag = 'scoped memory for card_classifier_forward.1']
    #allocation4 [shape = 's32[1]{0}', space=sflag, size = 0x4, scoped, tag = 'scoped memory for card_classifier_forward.1']
    #allocation5 [shape = 'u8[65536]{0}', space=vmem, size = 0x10000, scoped, tag = 'input window, operand 1, single buffered']
    #allocation6 [shape = 's32[1]{0}', space=sflag, size = 0x4, scoped, tag = 'scoped memory for card_classifier_forward.1']
    #allocation7 [shape = 'u8[4096]{0}', space=vmem, size = 0x1000, scoped, tag = 'output window, operand 0, single buffered']
    %8 = vsyncpa [#allocation3], 0
    %9 = vsyncpa [#allocation6], 0
    %10 = vsyncpa [#allocation4], 0
    // Predicated region
    $region2: #{card_classifier_forward.1} parent=1 // pred_check
      _
    $region3: #{card_classifier_forward.1} parent=1 // pred_check_branch
      %12 = sbr.rel (0) target = $region5
    $region4: #{card_classifier_forward.1} parent=1 // pred_region
      %s14 = ssub.s32 256, 256
      %15 = vsyncadd [#allocation3], %s14
      %s17 = sshll.u32 [#allocation2], 4
      %s18 = int_to_ptr.vmem [resolvable:$true] %s17
      %20 = dma.hbm_to_vmem [thread:$0]  %s0, 256, %s18, [#allocation3]
    $region5: #{card_classifier_forward.1} parent=1 // pred_fallthru
      _
    // Predicated region
    $region6: #{card_classifier_forward.1} parent=1 // pred_check
      _
    $region7: #{card_classifier_forward.1} parent=1 // pred_check_branch
      %22 = sbr.rel (0) target = $region9
    $region8: #{card_classifier_forward.1} parent=1 // pred_region
      %s24 = ssub.s32 2048, 2048
      %25 = vsyncadd [#allocation6], %s24
      %s26 = sshll.u32 [#allocation5], 4
      %s27 = int_to_ptr.vmem [resolvable:$true] %s26
      %32 = dma.hbm_to_vmem [thread:$0]  %s1, 2048, %s27, [#allocation6], 64, 64, 4
    $region9: #{card_classifier_forward.1} parent=1 // pred_fallthru
      _
    // Predicated region
    $region10: #{card_classifier_forward.1} parent=1 // pred_check
      _
    $region11: #{card_classifier_forward.1} parent=1 // pred_check_branch
      %34 = sbr.rel (0) target = $region13
    $region12: #{card_classifier_forward.1} parent=1 // pred_region
      _
    $region13: #{card_classifier_forward.1} parent=1 // pred_fallthru
      _
    // Predicated region
    $region14: #{card_classifier_forward.1} parent=1 // pred_check
      _
    $region15: #{card_classifier_forward.1} parent=1 // pred_check_branch
      %36 = sbr.rel (0) target = $region17
    $region16: #{card_classifier_forward.1} parent=1 // pred_region
      %37 = dma.done [#allocation3], 256
    $region17: #{card_classifier_forward.1} parent=1 // pred_fallthru
      _
    // Predicated region
    $region18: #{card_classifier_forward.1} parent=1 // pred_check
      _
    $region19: #{card_classifier_forward.1} parent=1 // pred_check_branch
      %39 = sbr.rel (0) target = $region21
    $region20: #{card_classifier_forward.1} parent=1 // pred_region
      %40 = dma.done [#allocation6], 2048
    $region21: #{card_classifier_forward.1} parent=1 // pred_fallthru
      _
    %v42 = vld [vmem:[#allocation2] sm:$0xff]
    %v43 = vld [vmem:[#allocation2 + $0x8] sm:$0xff]
    %v44 = vpack.c.bf16 %v42, %v42
    %v45 = vpack.c.bf16 %v43, %v43
    %v46 = vld [vmem:[#allocation5] sm:$0xf]
    %v47 = vld [vmem:[#allocation5 + $0x4] sm:$0xf]
    %v48 = vld [vmem:[#allocation5 + $0x8] sm:$0xf]
    %v49 = vld [vmem:[#allocation5 + $0xc] sm:$0xf]
    %v50 = vld [vmem:[#allocation5 + $0x10] sm:$0xf]
    %v51 = vld [vmem:[#allocation5 + $0x14] sm:$0xf]
    %v52 = vld [vmem:[#allocation5 + $0x18] sm:$0xf]
    %v53 = vld [vmem:[#allocation5 + $0x1c] sm:$0xf]
    %v54 = vld [vmem:[#allocation5 + $0x20] sm:$0xf]
    %v55 = vld [vmem:[#allocation5 + $0x24] sm:$0xf]
    %v56 = vld [vmem:[#allocation5 + $0x28] sm:$0xf]
    %v57 = vld [vmem:[#allocation5 + $0x2c] sm:$0xf]
    %v58 = vld [vmem:[#allocation5 + $0x30] sm:$0xf]
    %v59 = vld [vmem:[#allocation5 + $0x34] sm:$0xf]
    %v60 = vld [vmem:[#allocation5 + $0x38] sm:$0xf]
    %v61 = vld [vmem:[#allocation5 + $0x3c] sm:$0xf]
    %v62 = vld [vmem:[#allocation5 + $0x40] sm:$0xf]
    %v63 = vld [vmem:[#allocation5 + $0x44] sm:$0xf]
    %v64 = vld [vmem:[#allocation5 + $0x48] sm:$0xf]
    %v65 = vld [vmem:[#allocation5 + $0x4c] sm:$0xf]
    %v66 = vld [vmem:[#allocation5 + $0x50] sm:$0xf]
    %v67 = vld [vmem:[#allocation5 + $0x54] sm:$0xf]
    %v68 = vld [vmem:[#allocation5 + $0x58] sm:$0xf]
    %v69 = vld [vmem:[#allocation5 + $0x5c] sm:$0xf]
    %v70 = vld [vmem:[#allocation5 + $0x60] sm:$0xf]
    %v71 = vld [vmem:[#allocation5 + $0x64] sm:$0xf]
    %v72 = vld [vmem:[#allocation5 + $0x68] sm:$0xf]
    %v73 = vld [vmem:[#allocation5 + $0x6c] sm:$0xf]
    %v74 = vld [vmem:[#allocation5 + $0x70] sm:$0xf]
    %v75 = vld [vmem:[#allocation5 + $0x74] sm:$0xf]
    %v76 = vld [vmem:[#allocation5 + $0x78] sm:$0xf]
    %v77 = vld [vmem:[#allocation5 + $0x7c] sm:$0xf]
    %v78 = vld [vmem:[%s2] sm:$0x1]
    %v80 = vlaneseq
    %v81 = vshrl.u32 %v80, 7
    %v82 = vsub.s32 0, %v81
    %v83 = vrot.slane %v78, %v82
    %v117 = vunpack.c.l.b16 %v46
    %v118 = vunpack.c.l.b16 %v47
    %v119 = vunpack.c.l.b16 %v48
    %v120 = vunpack.c.l.b16 %v49
    %v121 = vunpack.c.l.b16 %v50
    %v122 = vunpack.c.l.b16 %v51
    %v123 = vunpack.c.l.b16 %v52
    %v124 = vunpack.c.l.b16 %v53
    %v125 = vunpack.c.l.b16 %v54
    %v126 = vunpack.c.l.b16 %v55
    %v127 = vunpack.c.l.b16 %v56
    %v128 = vunpack.c.l.b16 %v57
    %v129 = vunpack.c.l.b16 %v58
    %v130 = vunpack.c.l.b16 %v59
    %v131 = vunpack.c.l.b16 %v60
    %v132 = vunpack.c.l.b16 %v61
    %v133 = vunpack.c.l.b16 %v62
    %v134 = vunpack.c.l.b16 %v63
    %v135 = vunpack.c.l.b16 %v64
    %v136 = vunpack.c.l.b16 %v65
    %v137 = vunpack.c.l.b16 %v66
    %v138 = vunpack.c.l.b16 %v67
    %v139 = vunpack.c.l.b16 %v68
    %v140 = vunpack.c.l.b16 %v69
    %v141 = vunpack.c.l.b16 %v70
    %v142 = vunpack.c.l.b16 %v71
    %v143 = vunpack.c.l.b16 %v72
    %v144 = vunpack.c.l.b16 %v73
    %v145 = vunpack.c.l.b16 %v74
    %v146 = vunpack.c.l.b16 %v75
    %v147 = vunpack.c.l.b16 %v76
    %v148 = vunpack.c.l.b16 %v77
    %v149 = vpack.c.b16 %v118, %v117
    %v150 = vpack.c.b16 %v120, %v119
    %v151 = vpack.c.b16 %v122, %v121
    %v152 = vpack.c.b16 %v124, %v123
    %v153 = vpack.c.b16 %v126, %v125
    %v154 = vpack.c.b16 %v128, %v127
    %v155 = vpack.c.b16 %v130, %v129
    %v156 = vpack.c.b16 %v132, %v131
    %v157 = vpack.c.b16 %v134, %v133
    %v158 = vpack.c.b16 %v136, %v135
    %v159 = vpack.c.b16 %v138, %v137
    %v160 = vpack.c.b16 %v140, %v139
    %v161 = vpack.c.b16 %v142, %v141
    %v162 = vpack.c.b16 %v144, %v143
    %v163 = vpack.c.b16 %v146, %v145
    %v164 = vpack.c.b16 %v148, %v147
    %181 = vmatprep.subr.bf16.mxu0 0
    %182 = vmatpush1.bf16.msra.mxu0 %v149
    %183 = vmatprep.subr.bf16.mxu0 0
    %184 = vmatpush1.bf16.msra.mxu0 %v150
    %185 = vmatprep.subr.bf16.mxu0 0
    %186 = vmatpush1.bf16.msra.mxu0 %v151
    %187 = vmatprep.subr.bf16.mxu0 0
    %188 = vmatpush1.bf16.msra.mxu0 %v152
    %189 = vmatprep.subr.bf16.mxu0 0
    %190 = vmatpush1.bf16.msra.mxu0 %v153
    %191 = vmatprep.subr.bf16.mxu0 0
    %192 = vmatpush1.bf16.msra.mxu0 %v154
    %193 = vmatprep.subr.bf16.mxu0 0
    %194 = vmatpush1.bf16.msra.mxu0 %v155
    %195 = vmatprep.subr.bf16.mxu0 0
    %196 = vmatpush1.bf16.msra.mxu0 %v156
    %197 = vmatprep.subr.bf16.mxu0 0
    %198 = vmatpush1.bf16.msra.mxu0 %v157
    %199 = vmatprep.subr.bf16.mxu0 0
    %200 = vmatpush1.bf16.msra.mxu0 %v158
    %201 = vmatprep.subr.bf16.mxu0 0
    %202 = vmatpush1.bf16.msra.mxu0 %v159
    %203 = vmatprep.subr.bf16.mxu0 0
    %204 = vmatpush1.bf16.msra.mxu0 %v160
    %205 = vmatprep.subr.bf16.mxu0 0
    %206 = vmatpush1.bf16.msra.mxu0 %v161
    %207 = vmatprep.subr.bf16.mxu0 0
    %208 = vmatpush1.bf16.msra.mxu0 %v162
    %209 = vmatprep.subr.bf16.mxu0 0
    %210 = vmatpush1.bf16.msra.mxu0 %v163
    %211 = vmatprep.subr.bf16.mxu0 0
    %212 = vmatpush1.bf16.msra.mxu0 %v164
    %213 = vmatprep.mubr.bf16.mxu0 %v45
    %214 = vmatmul.mubr.bf16.gmra.mrb[0].mxu0 %v44
    %v215 = vpop.f32.mrb[0].mxu0
    %v216 = vadd.f32 %v83, %v215
    %v217 = vpop.f32.mrb[0].mxu0
    %v218 = vpop.f32.mrb[0].mxu0
    %v219 = vpop.f32.mrb[0].mxu0
    %220 = vdwg.mxu0
    %221 = vst [vmem:[#allocation7] sm:$0xff] %v216
    // Predicated region
    $region22: #{card_classifier_forward.1} parent=1 // pred_check
      _
    $region23: #{card_classifier_forward.1} parent=1 // pred_check_branch
      %223 = sbr.rel (0) target = $region25
    $region24: #{card_classifier_forward.1} parent=1 // pred_region
      %s225 = ssub.s32 128, 128
      %226 = vsyncadd [#allocation4], %s225
      %s228 = sshll.u32 [#allocation7], 4
      %s229 = int_to_ptr.vmem [resolvable:$true] %s228
      %231 = dma.vmem_to_hbm [thread:$0]  %s229, 128, %s3, [#allocation4]
    $region25: #{card_classifier_forward.1} parent=1 // pred_fallthru
      _
    // Predicated region
    $region26: #{card_classifier_forward.1} parent=1 // pred_check
      _
    $region27: #{card_classifier_forward.1} parent=1 // pred_check_branch
      %233 = sbr.rel (0) target = $region29
    $region28: #{card_classifier_forward.1} parent=1 // pred_region
      %234 = dma.done [#allocation4], 128
    $region29: #{card_classifier_forward.1} parent=1 // pred_fallthru
      _
    %235 = vsyncpa [#allocation3], 1
    %236 = vsyncpa [#allocation6], 1
    %237 = vsyncpa [#allocation4], 1

</llo_original>
